<compile_context>
chip_gen: v7x
topology: tpu7x:2x2x1
jax: 0.10.0
libtpu: 0.0.40
codegen_flags: <defaults>
</compile_context>

<pallas_src>
import numpy as np
import jax
import jax.numpy as jnp
from jax.experimental import pallas as pl
from jax.experimental.pallas import tpu as pltpu

_LANES = 128      # vreg lane width
_SUBLANES = 8     # vreg sublane count


def _packed_glu_kernel(a_ref, b_ref, o_ref):
    """o = a * sigmoid(b) on one aligned (rows, lanes) VMEM tile.

    PyTorch F.glu: first half (a) gated by sigmoid of second half (b).
    Padding rows/lanes are zeros -> 0 * sigmoid(0) = 0, sliced off outside.
    """
    o_ref[...] = a_ref[...] * jax.nn.sigmoid(b_ref[...])


def _round_up(n, m):
    return (n + m - 1) // m * m


@jax.jit
def model_forward(x, y, z):
    glu_args = ((x, 0), (y, 0), (y, 1), (z, 0), (z, 1), (z, 2))

    # Split each input along its glu dim (slice only) and flatten the halves.
    a_rows, b_rows, half_shapes = [], [], []
    for t, d in glu_args:
        a, b = jnp.split(t, 2, axis=d)
        half_shapes.append(a.shape)
        a_rows.append(a.reshape(-1))
        b_rows.append(b.reshape(-1))

    n_glu = len(glu_args)
    max_half = max(int(r.size) for r in a_rows)
    # One GLU per row; lane width = 128-multiple covering the largest half.
    lane_w = _round_up(max(max_half, _LANES), _LANES)
    n_rows = _round_up(n_glu, _SUBLANES)

    def pack(rows):
        padded = [jnp.pad(r, (0, lane_w - int(r.size))) for r in rows]
        slab = jnp.stack(padded, axis=0)                       # (n_glu, lane_w)
        return jnp.pad(slab, ((0, n_rows - n_glu), (0, 0)))    # (n_rows, lane_w)

    a_slab = pack(a_rows)
    b_slab = pack(b_rows)

    slab_elems = n_rows * lane_w
    itemsize = jnp.dtype(x.dtype).itemsize
    cost = pl.CostEstimate(
        flops=2 * slab_elems,                      # mul + gate combine
        transcendentals=slab_elems,                # sigmoid per slab element
        bytes_accessed=3 * slab_elems * itemsize,  # what is actually DMA'd
    )

    # Single launch, no grid, full slabs resident in VMEM.
    o_slab = pl.pallas_call(
        _packed_glu_kernel,
        out_shape=jax.ShapeDtypeStruct((n_rows, lane_w), x.dtype),
        in_specs=[pl.BlockSpec(memory_space=pltpu.MemorySpace.VMEM)] * 2,
        out_specs=pl.BlockSpec(memory_space=pltpu.MemorySpace.VMEM),
        cost_estimate=cost,
    )(a_slab, b_slab)

    # Unpack row i -> original (half-along-glu-dim) shape.
    outs = []
    for i, shape in enumerate(half_shapes):
        n = int(np.prod(shape))
        outs.append(o_slab[i, :n].reshape(shape))
    return tuple(outs)


def _ref_glu(t, dim):
    a, b = jnp.split(t, 2, axis=dim)
    return a * jax.nn.sigmoid(b)


if __name__ == "__main__":
    key = jax.random.PRNGKey(0)
    kx, ky, kz = jax.random.split(key, 3)

    # Small shapes; every glu'd dim is even (mirrors the pnnx test intent).
    x = jax.random.normal(kx, (16,), dtype=jnp.float32)
    y = jax.random.normal(ky, (4, 16), dtype=jnp.float32)
    z = jax.random.normal(kz, (2, 4, 16), dtype=jnp.float32)

    outs = model_forward(x, y, z)
    outs = jax.block_until_ready(outs)

    refs = (
        _ref_glu(x, 0),
        _ref_glu(y, 0),
        _ref_glu(y, 1),
        _ref_glu(z, 0),
        _ref_glu(z, 1),
        _ref_glu(z, 2),
    )
    for o, r in zip(outs, refs):
        assert o.shape == r.shape and o.dtype == r.dtype
        np.testing.assert_allclose(np.asarray(o), np.asarray(r),
                                   rtol=1e-6, atol=1e-6)

    print("KERNEL_OK")
</pallas_src>

<mosaic_0001>
module attributes {stable_mosaic.version = 11 : i64} {
  func.func @_packed_glu_kernel(%arg0: memref<8x128xf32, #tpu.memory_space<vmem>>, %arg1: memref<8x128xf32, #tpu.memory_space<vmem>>, %arg2: memref<8x128xf32, #tpu.memory_space<vmem>>) attributes {dimension_semantics = [], scalar_prefetch = 0 : i64, scratch_operands = 0 : i64, tpu.core_type = #tpu.core_type<tc>} {
    %c0 = arith.constant 0 : index
    %c0_0 = arith.constant 0 : index
    %0 = vector.load %arg0[%c0, %c0_0] : memref<8x128xf32, #tpu.memory_space<vmem>>, vector<8x128xf32>
    %c0_1 = arith.constant 0 : index
    %c0_2 = arith.constant 0 : index
    %1 = vector.load %arg1[%c0_1, %c0_2] : memref<8x128xf32, #tpu.memory_space<vmem>>, vector<8x128xf32>
    %2 = arith.negf %1 : vector<8x128xf32>
    %3 = math.exp %2 : vector<8x128xf32>
    %cst = arith.constant 1.000000e+00 : f32
    %4 = vector.broadcast %cst : f32 to vector<8x128xf32>
    %5 = arith.addf %4, %3 : vector<8x128xf32>
    %6 = arith.divf %4, %5 : vector<8x128xf32>
    %7 = arith.mulf %0, %6 : vector<8x128xf32>
    %c0_3 = arith.constant 0 : index
    %c0_4 = arith.constant 0 : index
    %8 = vector.load %arg2[%c0_3, %c0_4] : memref<8x128xf32, #tpu.memory_space<vmem>>, vector<8x128xf32>
    tpu.vector_store %arg2[%c0_3, %c0_4], %7 {strides = array<i32>} : memref<8x128xf32, #tpu.memory_space<vmem>>, vector<8x128xf32>,
    return
  }
}

</mosaic_0001>

<llo_original>
// kernel: squeeze.7
$region0: #{squeeze.7}
  %s0 = inlined_call_operand.vmem [shape: f32[32], index: 0, kind: input, shape index: {}]
  %s1 = inlined_call_operand.hbm [shape: f32[2,16], index: 1, kind: output, shape index: {}]
  $region1: #{squeeze.7} parent=0
    #allocation0 [shape = 'u8[1024]{0}', space=vmem, size = 0x400, scoped, tag = 'operand span for operand 1']
    #allocation1 [shape = 's32[1]{0}', space=sflag, size = 0x4, scoped, tag = 'scoped memory for squeeze.7']
    #allocation2 [shape = 'u8[4096]{0}', space=vmem, size = 0x1000, scoped, tag = 'scoped mem for output reshape']
    #allocation3 [shape = 'u8[4096]{0}', space=vmem, size = 0x1000, scoped, tag = 'scoped mem for input reshape']
    %2 = vsyncpa [#allocation1], 0
    %s4 = sshllo.u32 0, 1
    %v5 = vld [vmem:[%s0] sm:%s4]
    %6 = vst [vmem:[#allocation3] sm:%s4] %v5
    %v7 = vld [vmem:[#allocation3] sm:$0x1]
    %vm8 = vcmask 130048
    %9 = vst.msk [vmem:[#allocation2] sm:$0x1] %vm8, %v7
    %v10 = vld [vmem:[#allocation3] sm:$0x1]
    %11 = vrot.lane.b32.xlu0 %v10, 112
    %v12 = vpop.permute.xlu0 %11
    %vm13 = vcmask 130048
    %s14 = scalar_lea.vmem [#allocation2], 1
    %15 = vst.msk [vmem:[%s14] sm:$0x1] %vm13, %v12
    %s17 = sshllo.u32 0, 2
    %v19 = vld [vmem:[#allocation2] sm:%s17]
    %s20 = sshllo.u32 0, 2
    %21 = vst [vmem:[#allocation0] sm:%s20] %v19
    %s23 = ssub.s32 32, 32
    %24 = vsyncadd [#allocation1], %s23
    %s26 = sshll.u32 [#allocation0], 4
    %s27 = int_to_ptr.vmem [resolvable:$true] %s26
    %29 = dma.vmem_to_hbm [thread:$0]  %s27, 32, %s1, [#allocation1]
    %30 = dma.done [#allocation1], 32
    %31 = vsyncpa [#allocation1], 1

// kernel: squeeze.8
$region0: #{squeeze.8}
  %s0 = inlined_call_operand.vmem [shape: f32[32], index: 0, kind: input, shape index: {}]
  %s1 = inlined_call_operand.hbm [shape: f32[4,8], index: 1, kind: output, shape index: {}]
  $region1: #{squeeze.8} parent=0
    #allocation0 [shape = 'u8[2048]{0}', space=vmem, size = 0x800, scoped, tag = 'operand span for operand 1']
    #allocation1 [shape = 's32[1]{0}', space=sflag, size = 0x4, scoped, tag = 'scoped memory for squeeze.8']
    #allocation2 [shape = 'u8[4096]{0}', space=vmem, size = 0x1000, scoped, tag = 'scoped mem for output reshape']
    #allocation3 [shape = 'u8[4096]{0}', space=vmem, size = 0x1000, scoped, tag = 'scoped mem for input reshape']
    %2 = vsyncpa [#allocation1], 0
    %s4 = sshllo.u32 0, 1
    %v5 = vld [vmem:[%s0] sm:%s4]
    %6 = vst [vmem:[#allocation3] sm:%s4] %v5
    %v7 = vld [vmem:[#allocation3] sm:$0x1]
    %vm8 = vcmask 64512
    %9 = vst.msk [vmem:[#allocation2] sm:$0x1] %vm8, %v7
    %v10 = vld [vmem:[#allocation3] sm:$0x1]
    %11 = vrot.lane.b32.xlu0 %v10, 120
    %v12 = vpop.permute.xlu0 %11
    %vm13 = vcmask 64512
    %s14 = scalar_lea.vmem [#allocation2], 1
    %15 = vst.msk [vmem:[%s14] sm:$0x1] %vm13, %v12
    %v16 = vld [vmem:[#allocation3] sm:$0x1]
    %17 = vrot.lane.b32.xlu0 %v16, 112
    %v18 = vpop.permute.xlu0 %17
    %vm19 = vcmask 64512
    %s20 = scalar_lea.vmem [#allocation2], 2
    %21 = vst.msk [vmem:[%s20] sm:$0x1] %vm19, %v18
    %v22 = vld [vmem:[#allocation3] sm:$0x1]
    %23 = vrot.lane.b32.xlu0 %v22, 104
    %v24 = vpop.permute.xlu0 %23
    %vm25 = vcmask 64512
    %s26 = scalar_lea.vmem [#allocation2], 3
    %27 = vst.msk [vmem:[%s26] sm:$0x1] %vm25, %v24
    %s29 = sshllo.u32 0, 4
    %v31 = vld [vmem:[#allocation2] sm:%s29]
    %s32 = sshllo.u32 0, 4
    %33 = vst [vmem:[#allocation0] sm:%s32] %v31
    %s35 = ssub.s32 64, 64
    %36 = vsyncadd [#allocation1], %s35
    %s38 = sshll.u32 [#allocation0], 4
    %s39 = int_to_ptr.vmem [resolvable:$true] %s38
    %41 = dma.vmem_to_hbm [thread:$0]  %s39, 64, %s1, [#allocation1]
    %42 = dma.done [#allocation1], 64
    %43 = vsyncpa [#allocation1], 1

// kernel: squeeze.10
$region0: #{squeeze.10}
  %s0 = inlined_call_operand.vmem [shape: f32[64], index: 0, kind: input, shape index: {}]
  %s1 = inlined_call_operand.hbm [shape: f32[2,2,16], index: 1, kind: output, shape index: {}]
  $region1: #{squeeze.10} parent=0
    #allocation0 [shape = 'u8[2048]{0}', space=vmem, size = 0x800, scoped, tag = 'operand span for operand 1']
    #allocation1 [shape = 's32[1]{0}', space=sflag, size = 0x4, scoped, tag = 'scoped memory for squeeze.10']
    #allocation2 [shape = 'u8[8192]{0}', space=vmem, size = 0x2000, scoped, tag = 'scoped mem for output reshape']
    #allocation3 [shape = 'u8[4096]{0}', space=vmem, size = 0x1000, scoped, tag = 'scoped mem for input reshape']
    %2 = vsyncpa [#allocation1], 0
    %s4 = sshllo.u32 0, 1
    %v5 = vld [vmem:[%s0] sm:%s4]
    %6 = vst [vmem:[#allocation3] sm:%s4] %v5
    %v7 = vld [vmem:[#allocation3] sm:$0x1]
    %vm8 = vcmask 130048
    %9 = vst.msk [vmem:[#allocation2] sm:$0x1] %vm8, %v7
    %v10 = vld [vmem:[#allocation3] sm:$0x1]
    %11 = vrot.lane.b32.xlu0 %v10, 112
    %v12 = vpop.permute.xlu0 %11
    %vm13 = vcmask 130048
    %s14 = scalar_lea.vmem [#allocation2], 1
    %15 = vst.msk [vmem:[%s14] sm:$0x1] %vm13, %v12
    %v16 = vld [vmem:[#allocation3] sm:$0x1]
    %17 = vrot.lane.b32.xlu0 %v16, 96
    %v18 = vpop.permute.xlu0 %17
    %vm19 = vcmask 130048
    %s20 = scalar_lea.vmem [#allocation2], 8
    %21 = vst.msk [vmem:[%s20] sm:$0x1] %vm19, %v18
    %v22 = vld [vmem:[#allocation3] sm:$0x1]
    %23 = vrot.lane.b32.xlu0 %v22, 80
    %v24 = vpop.permute.xlu0 %23
    %vm25 = vcmask 130048
    %s26 = scalar_lea.vmem [#allocation2], 9
    %27 = vst.msk [vmem:[%s26] sm:$0x1] %vm25, %v24
    %s29 = sshllo.u32 0, 2
    %v31 = vld [vmem:[#allocation2] sm:%s29]
    %s32 = sshllo.u32 0, 2
    %33 = vst [vmem:[#allocation0] sm:%s32] %v31
    %s34 = scalar_lea.vmem [#allocation2], 8
    %v35 = vld [vmem:[%s34] sm:%s29]
    %s36 = sshllo.u32 0, 2
    %s37 = scalar_lea.vmem [#allocation0], 2
    %38 = vst [vmem:[%s37] sm:%s36] %v35
    %s40 = ssub.s32 64, 64
    %41 = vsyncadd [#allocation1], %s40
    %s43 = sshll.u32 [#allocation0], 4
    %s44 = int_to_ptr.vmem [resolvable:$true] %s43
    %46 = dma.vmem_to_hbm [thread:$0]  %s44, 64, %s1, [#allocation1]
    %47 = dma.done [#allocation1], 64
    %48 = vsyncpa [#allocation1], 1

// kernel: squeeze.9
$region0: #{squeeze.9}
  %s0 = inlined_call_operand.vmem [shape: f32[64], index: 0, kind: input, shape index: {}]
  %s1 = inlined_call_operand.hbm [shape: f32[1,4,16], index: 1, kind: output, shape index: {}]
  $region1: #{squeeze.9} parent=0
    #allocation0 [shape = 'u8[2048]{0}', space=vmem, size = 0x800, scoped, tag = 'operand span for operand 1']
    #allocation1 [shape = 's32[1]{0}', space=sflag, size = 0x4, scoped, tag = 'scoped memory for squeeze.9']
    #allocation2 [shape = 'u8[4096]{0}', space=vmem, size = 0x1000, scoped, tag = 'scoped mem for output reshape']
    #allocation3 [shape = 'u8[4096]{0}', space=vmem, size = 0x1000, scoped, tag = 'scoped mem for input reshape']
    %2 = vsyncpa [#allocation1], 0
    %s4 = sshllo.u32 0, 1
    %v5 = vld [vmem:[%s0] sm:%s4]
    %6 = vst [vmem:[#allocation3] sm:%s4] %v5
    %v7 = vld [vmem:[#allocation3] sm:$0x1]
    %vm8 = vcmask 130048
    %9 = vst.msk [vmem:[#allocation2] sm:$0x1] %vm8, %v7
    %v10 = vld [vmem:[#allocation3] sm:$0x1]
    %11 = vrot.lane.b32.xlu0 %v10, 112
    %v12 = vpop.permute.xlu0 %11
    %vm13 = vcmask 130048
    %s14 = scalar_lea.vmem [#allocation2], 1
    %15 = vst.msk [vmem:[%s14] sm:$0x1] %vm13, %v12
    %v16 = vld [vmem:[#allocation3] sm:$0x1]
    %17 = vrot.lane.b32.xlu0 %v16, 96
    %v18 = vpop.permute.xlu0 %17
    %vm19 = vcmask 130048
    %s20 = scalar_lea.vmem [#allocation2], 2
    %21 = vst.msk [vmem:[%s20] sm:$0x1] %vm19, %v18
    %v22 = vld [vmem:[#allocation3] sm:$0x1]
    %23 = vrot.lane.b32.xlu0 %v22, 80
    %v24 = vpop.permute.xlu0 %23
    %vm25 = vcmask 130048
    %s26 = scalar_lea.vmem [#allocation2], 3
    %27 = vst.msk [vmem:[%s26] sm:$0x1] %vm25, %v24
    %s29 = sshllo.u32 0, 4
    %v31 = vld [vmem:[#allocation2] sm:%s29]
    %s32 = sshllo.u32 0, 4
    %33 = vst [vmem:[#allocation0] sm:%s32] %v31
    %s35 = ssub.s32 64, 64
    %36 = vsyncadd [#allocation1], %s35
    %s38 = sshll.u32 [#allocation0], 4
    %s39 = int_to_ptr.vmem [resolvable:$true] %s38
    %41 = dma.vmem_to_hbm [thread:$0]  %s39, 64, %s1, [#allocation1]
    %42 = dma.done [#allocation1], 64
    %43 = vsyncpa [#allocation1], 1

// kernel: squeeze.11
$region0: #{squeeze.11}
  %s0 = inlined_call_operand.vmem [shape: f32[64], index: 0, kind: input, shape index: {}]
  %s1 = inlined_call_operand.hbm [shape: f32[2,4,8], index: 1, kind: output, shape index: {}]
  $region1: #{squeeze.11} parent=0
    #allocation0 [shape = 'u8[4096]{0}', space=vmem, size = 0x1000, scoped, tag = 'operand span for operand 1']
    #allocation1 [shape = 's32[1]{0}', space=sflag, size = 0x4, scoped, tag = 'scoped memory for squeeze.11']
    #allocation2 [shape = 'u8[8192]{0}', space=vmem, size = 0x2000, scoped, tag = 'scoped mem for output reshape']
    #allocation3 [shape = 'u8[4096]{0}', space=vmem, size = 0x1000, scoped, tag = 'scoped mem for input reshape']
    %2 = vsyncpa [#allocation1], 0
    %s4 = sshllo.u32 0, 1
    %v5 = vld [vmem:[%s0] sm:%s4]
    %6 = vst [vmem:[#allocation3] sm:%s4] %v5
    %v7 = vld [vmem:[#allocation3] sm:$0x1]
    %vm8 = vcmask 64512
    %9 = vst.msk [vmem:[#allocation2] sm:$0x1] %vm8, %v7
    %v10 = vld [vmem:[#allocation3] sm:$0x1]
    %11 = vrot.lane.b32.xlu0 %v10, 120
    %v12 = vpop.permute.xlu0 %11
    %vm13 = vcmask 64512
    %s14 = scalar_lea.vmem [#allocation2], 1
    %15 = vst.msk [vmem:[%s14] sm:$0x1] %vm13, %v12
    %v16 = vld [vmem:[#allocation3] sm:$0x1]
    %17 = vrot.lane.b32.xlu0 %v16, 112
    %v18 = vpop.permute.xlu0 %17
    %vm19 = vcmask 64512
    %s20 = scalar_lea.vmem [#allocation2], 2
    %21 = vst.msk [vmem:[%s20] sm:$0x1] %vm19, %v18
    %v22 = vld [vmem:[#allocation3] sm:$0x1]
    %23 = vrot.lane.b32.xlu0 %v22, 104
    %v24 = vpop.permute.xlu0 %23
    %vm25 = vcmask 64512
    %s26 = scalar_lea.vmem [#allocation2], 3
    %27 = vst.msk [vmem:[%s26] sm:$0x1] %vm25, %v24
    %v28 = vld [vmem:[#allocation3] sm:$0x1]
    %29 = vrot.lane.b32.xlu0 %v28, 96
    %v30 = vpop.permute.xlu0 %29
    %vm31 = vcmask 64512
    %s32 = scalar_lea.vmem [#allocation2], 8
    %33 = vst.msk [vmem:[%s32] sm:$0x1] %vm31, %v30
    %v34 = vld [vmem:[#allocation3] sm:$0x1]
    %35 = vrot.lane.b32.xlu0 %v34, 88
    %v36 = vpop.permute.xlu0 %35
    %vm37 = vcmask 64512
    %s38 = scalar_lea.vmem [#allocation2], 9
    %39 = vst.msk [vmem:[%s38] sm:$0x1] %vm37, %v36
    %v40 = vld [vmem:[#allocation3] sm:$0x1]
    %41 = vrot.lane.b32.xlu0 %v40, 80
    %v42 = vpop.permute.xlu0 %41
    %vm43 = vcmask 64512
    %s44 = scalar_lea.vmem [#allocation2], 10
    %45 = vst.msk [vmem:[%s44] sm:$0x1] %vm43, %v42
    %v46 = vld [vmem:[#allocation3] sm:$0x1]
    %47 = vrot.lane.b32.xlu0 %v46, 72
    %v48 = vpop.permute.xlu0 %47
    %vm49 = vcmask 64512
    %s50 = scalar_lea.vmem [#allocation2], 11
    %51 = vst.msk [vmem:[%s50] sm:$0x1] %vm49, %v48
    %s53 = sshllo.u32 0, 4
    %v55 = vld [vmem:[#allocation2] sm:%s53]
    %s56 = sshllo.u32 0, 4
    %57 = vst [vmem:[#allocation0] sm:%s56] %v55
    %s58 = scalar_lea.vmem [#allocation2], 8
    %v59 = vld [vmem:[%s58] sm:%s53]
    %s60 = sshllo.u32 0, 4
    %s61 = scalar_lea.vmem [#allocation0], 4
    %62 = vst [vmem:[%s61] sm:%s60] %v59
    %s64 = ssub.s32 128, 128
    %65 = vsyncadd [#allocation1], %s64
    %s67 = sshll.u32 [#allocation0], 4
    %s68 = int_to_ptr.vmem [resolvable:$true] %s67
    %70 = dma.vmem_to_hbm [thread:$0]  %s68, 128, %s1, [#allocation1]
    %71 = dma.done [#allocation1], 128
    %72 = vsyncpa [#allocation1], 1

// kernel: model_forward.1
$region0: #{model_forward.1}
  #allocation0 [shape = 'u32[]', space=smem, size = 0x4, offset = 0x4, fixed_abs, tag = 'smem constant byte address 0x4 - core index']
  #allocation1 [shape = 'u32[144,128]{1,0:T(1,128)}', space=vmem, size = 0x12000, scoped, tag = 'internal scratch']
  %s0 = inlined_call_operand.vmem [shape: f32[8,128], index: 0, kind: input, shape index: {}]
  %s1 = inlined_call_operand.vmem [shape: f32[8,128], index: 1, kind: input, shape index: {}]
  %s2 = inlined_call_operand.vmem [shape: f32[8,128], index: 2, kind: output, shape index: {}]
  %s3 = sld [smem:[#allocation0]]
  $region18: #{model_forward.1} parent=0
    _
  %s5 = ssub.s32 1, %s3
  %s6 = scalar_select 0, %s5, %s3
  // Predicated region
  $region2: #{model_forward.1} parent=0 // pred_check
    _
  $region3: #{model_forward.1} parent=0 // pred_check_branch
    %8 = sbr.rel (0) target = $region5
  $region4: #{model_forward.1} parent=0 // pred_region
    _
  $region5: #{model_forward.1} parent=0 // pred_fallthru
    _
  // Predicated region
  $region6: #{model_forward.1} parent=0 // pred_check
    _
  $region7: #{model_forward.1} parent=0 // pred_check_branch
    %10 = sbr.rel (0) target = $region9
  $region8: #{model_forward.1} parent=0 // pred_region
    _
  $region9: #{model_forward.1} parent=0 // pred_fallthru
    _
  %v11 = vld [vmem:[%s0] sm:$0xff]
  %v12 = vld [vmem:[%s1] sm:$0xff]
  %v13 = vxor.u32 %v12, 2147483648
  %v14 = vmul.f32 %v13, 1.442695
  %v15 = vpow.pop %v14
  %v16 = vadd.f32 %v15, 1.0
  %v17 = vrcp.pop %v16
  %v18 = vmul.f32 1.0, %v17
  %v19 = vmul.f32 %v11, %v18
  %20 = vst [vmem:[%s2] sm:$0xff] %v19
  // Predicated region
  $region10: #{model_forward.1} parent=0 // pred_check
    _
  $region11: #{model_forward.1} parent=0 // pred_check_branch
    %22 = sbr.rel (0) target = $region13
  $region12: #{model_forward.1} parent=0 // pred_region
    _
  $region13: #{model_forward.1} parent=0 // pred_fallthru
    _
  // Predicated region
  $region14: #{model_forward.1} parent=0 // pred_check
    _
  $region15: #{model_forward.1} parent=0 // pred_check_branch
    %24 = sbr.rel (0) target = $region17
  $region16: #{model_forward.1} parent=0 // pred_region
    _
  $region17: #{model_forward.1} parent=0 // pred_fallthru
    _

</llo_original>
